<compile_context>
chip_gen: v5e
topology: v5e:2x2
jax: 0.10.0
libtpu: 0.0.40
codegen_flags: <defaults>
</compile_context>

<pallas_src>
import math
from functools import partial

import jax
import jax.numpy as jnp
from jax.experimental import pallas as pl
from jax.experimental.pallas import tpu as pltpu

CHUNK = 128  # batch (lane) columns processed per inner chunk; one vreg lane-width


def critic_kernel(xT_ref, w1b1_ref, w2_ref, b2_ref, o_ref):
    # xT_ref  : (4, TILE_B)  f32  transposed state block (lane axis = batch)
    # w1b1_ref: (128, 5)     f32  packed [fc_1.weight (128,4) | fc_1.bias (128,1)]
    # w2_ref  : (8, 128)     f32  value_layer.weight in row 0, rows 1..7 zero
    # b2_ref  : (1,)         f32  value_layer.bias (SMEM scalar)
    # o_ref   : (1, TILE_B)  f32  lane-dense value row
    K, tile_b = xT_ref.shape
    n_chunks = tile_b // CHUNK

    # Hoisted once per grid step (loop-invariant).
    w1b1 = w1b1_ref[...]                               # (128, 5)
    w1_cols = [w1b1[:, k:k + 1] for k in range(K)]     # 4 x (128, 1)
    b1_col = w1b1[:, K:K + 1]                          # (128, 1)
    w2_slab = w2_ref[...]                              # (8, 128)
    b2 = b2_ref[0]

    # Statically-unrolled chunk loop over the batch lanes: the (128, CHUNK)
    # hidden tile lives only within one chunk, so nothing spills even for
    # tile_b = 2048.
    for c in range(n_chunks):
        off = c * CHUNK
        x_c = xT_ref[:, off:off + CHUNK]               # (4, CHUNK) static slice
        # Layer 1: hidden^T = relu(W1 @ x^T + b1) as K=4 broadcast FMAs (VPU).
        h = b1_col + w1_cols[0] * x_c[0:1, :]
        for k in range(1, K):
            h = h + w1_cols[k] * x_c[k:k + 1, :]
        h = jnp.maximum(h, 0.0)                        # (128, CHUNK)
        # Layer 2: full-K contraction on the otherwise idle MXU; row 0 is real.
        v = jnp.dot(w2_slab, h,
                    preferred_element_type=jnp.float32,
                    precision=jax.lax.Precision.HIGHEST)   # (8, CHUNK)
        o_ref[:, off:off + CHUNK] = v[0:1, :] + b2


def _round_up(x, m):
    return -(-x // m) * m


@partial(jax.jit, static_argnames=("tile_b", "state_transposed"))
def critic_forward(state, w1, b1, w2, b2, *, tile_b=None, state_transposed=False):
    """Critic forward pass.

    state: (B, 4) f32, or (4, B) if state_transposed=True (e.g. a transposed
    copy cached upstream and shared with the actor).
    Weights in PyTorch layout: w1 (128, 4), b1 (128,), w2 (1, 128), b2 (1,).
    Returns (B, 1) f32, matching the nn.Module output.
    """
    state = jnp.asarray(state, jnp.float32)
    xT = state if state_transposed else state.T        # (4, B): only input layout op
    K, B = xT.shape
    H = w1.shape[0]                                    # 128

    if tile_b is None:
        b_up = _round_up(B, CHUNK)
        if b_up <= 2048:
            tile_b = b_up                              # one big grid step
        else:
            # >= 2 grid steps so ("parallel",) can use both TensorCores on v7x,
            # while keeping steps large to amortize per-step overhead.
            tile_b = min(2048, _round_up(-(-b_up // 2), CHUNK))
    assert tile_b % CHUNK == 0

    b_pad = _round_up(B, tile_b)
    grid = (b_pad // tile_b,)

    if b_pad != B:                                     # pad only the ragged tail
        xT = jnp.pad(xT, ((0, 0), (0, b_pad - B)))

    # Packed, resident weight operands.
    w1b1 = jnp.concatenate(
        [w1.astype(jnp.float32), b1.astype(jnp.float32).reshape(H, 1)], axis=1)   # (128, 5)
    w2_slab = jnp.pad(w2.astype(jnp.float32).reshape(1, H), ((0, 7), (0, 0)))     # (8, 128)
    b2_s = jnp.asarray(b2, jnp.float32).reshape(1)                                 # (1,)

    out_row = pl.pallas_call(
        critic_kernel,
        out_shape=jax.ShapeDtypeStruct((1, b_pad), jnp.float32),
        grid=grid,
        in_specs=[
            pl.BlockSpec((K, tile_b), lambda i: (0, i)),            # state^T, batch-tiled
            pl.BlockSpec(memory_space=pltpu.MemorySpace.VMEM),      # [W1 | b1] resident
            pl.BlockSpec(memory_space=pltpu.MemorySpace.VMEM),      # W2 slab resident
            pl.BlockSpec(memory_space=pltpu.MemorySpace.SMEM),      # b2 scalar
        ],
        out_specs=pl.BlockSpec((1, tile_b), lambda i: (0, i)),
        compiler_params=pltpu.CompilerParams(
            dimension_semantics=("parallel",)),
    )(xT, w1b1, w2_slab, b2_s)

    # TODO(synk): if the consumer accepts a flat (B,) value vector, return
    # out_row[0, :B] directly and skip this lane->sublane relayout.
    return out_row[0, :B].reshape(B, 1)


def init_params(key):
    """Mirror PyTorch nn.Linear defaults, with value_layer.weight zeroed as in __init__."""
    k_w1, k_b1, k_b2 = jax.random.split(key, 3)
    bound1 = 1.0 / math.sqrt(4.0)
    w1 = jax.random.uniform(k_w1, (128, 4), jnp.float32, -bound1, bound1)  # fc_1.weight
    b1 = jax.random.uniform(k_b1, (128,), jnp.float32, -bound1, bound1)    # fc_1.bias
    bound2 = 1.0 / math.sqrt(128.0)
    w2 = jnp.zeros((1, 128), jnp.float32)                                  # value_layer.weight (zeroed)
    b2 = jax.random.uniform(k_b2, (1,), jnp.float32, -bound2, bound2)      # value_layer.bias
    return w1, b1, w2, b2


def _ref_forward(state, w1, b1, w2, b2):
    hp = jax.lax.Precision.HIGHEST
    h = jnp.maximum(jnp.dot(state, w1.T, precision=hp) + b1, 0.0)
    return jnp.dot(h, w2.T, precision=hp) + b2


if __name__ == "__main__":
    key = jax.random.PRNGKey(0)
    k_params, k_s1, k_s2, k_w2 = jax.random.split(key, 4)
    w1, b1, w2, b2 = init_params(k_params)

    # 1) CartPole-sized batch (8, 4) with the zero-initialized value head.
    s1 = jax.random.normal(k_s1, (8, 4), jnp.float32)
    out1 = jax.block_until_ready(critic_forward(s1, w1, b1, w2, b2))
    ref1 = _ref_forward(s1, w1, b1, w2, b2)
    assert out1.shape == (8, 1)
    assert jnp.allclose(out1, ref1, atol=1e-5, rtol=1e-5), "mismatch (zero value head)"

    # 2) Non-zero value head + ragged batch exercising the in-kernel chunk loop.
    bound2 = 1.0 / math.sqrt(128.0)
    w2_rand = jax.random.uniform(k_w2, (1, 128), jnp.float32, -bound2, bound2)
    s2 = jax.random.normal(k_s2, (300, 4), jnp.float32)
    out2 = jax.block_until_ready(critic_forward(s2, w1, b1, w2_rand, b2))
    ref2 = _ref_forward(s2, w1, b1, w2_rand, b2)
    assert out2.shape == (300, 1)
    assert jnp.allclose(out2, ref2, atol=2e-3, rtol=2e-3), "mismatch (random value head)"

    # 3) Multi-grid-step path (explicit small tile) and the pre-transposed-input path.
    out3 = jax.block_until_ready(critic_forward(s2, w1, b1, w2_rand, b2, tile_b=128))
    assert jnp.allclose(out3, ref2, atol=2e-3, rtol=2e-3), "mismatch (grid > 1)"

    out4 = jax.block_until_ready(
        critic_forward(s2.T, w1, b1, w2_rand, b2, state_transposed=True))
    assert jnp.allclose(out4, ref2, atol=2e-3, rtol=2e-3), "mismatch (transposed input)"

    print("KERNEL_OK")
</pallas_src>

<mosaic_0001>
module attributes {stable_mosaic.version = 11 : i64} {
  func.func @critic_kernel(%arg0: i32, %arg1: memref<4x128xf32, #tpu.memory_space<vmem>>, %arg2: memref<128x5xf32, #tpu.memory_space<vmem>>, %arg3: memref<8x128xf32, #tpu.memory_space<vmem>>, %arg4: memref<1xf32, #tpu.memory_space<smem>>, %arg5: memref<1x128xf32, #tpu.memory_space<vmem>>) attributes {dimension_semantics = [#tpu.dimension_semantics<parallel>], iteration_bounds = array<i64: 1>, scalar_prefetch = 0 : i64, scratch_operands = 0 : i64, tpu.core_type = #tpu.core_type<tc>, window_params = [{transform_indices = @transform_0, window_bounds = array<i64: 4, 128>}, {pipeline_mode = #tpu.pipeline_mode<synchronous>, transform_indices = @transform_1, window_bounds = array<i64: 128, 5>}, {pipeline_mode = #tpu.pipeline_mode<synchronous>, transform_indices = @transform_2, window_bounds = array<i64: 8, 128>}, {transform_indices = @transform_3, window_bounds = array<i64: 1>}, {transform_indices = @transform_4, window_bounds = array<i64: 1, 128>}]} {
    %c0 = arith.constant 0 : index
    %c0_0 = arith.constant 0 : index
    %0 = vector.load %arg2[%c0, %c0_0] : memref<128x5xf32, #tpu.memory_space<vmem>>, vector<128x5xf32>
    %1 = vector.extract_strided_slice %0 {offsets = [0, 0], sizes = [128, 1], strides = [1, 1]} : vector<128x5xf32> to vector<128x1xf32>
    %2 = vector.extract_strided_slice %0 {offsets = [0, 1], sizes = [128, 1], strides = [1, 1]} : vector<128x5xf32> to vector<128x1xf32>
    %3 = vector.extract_strided_slice %0 {offsets = [0, 2], sizes = [128, 1], strides = [1, 1]} : vector<128x5xf32> to vector<128x1xf32>
    %4 = vector.extract_strided_slice %0 {offsets = [0, 3], sizes = [128, 1], strides = [1, 1]} : vector<128x5xf32> to vector<128x1xf32>
    %5 = vector.extract_strided_slice %0 {offsets = [0, 4], sizes = [128, 1], strides = [1, 1]} : vector<128x5xf32> to vector<128x1xf32>
    %c0_1 = arith.constant 0 : index
    %c0_2 = arith.constant 0 : index
    %6 = vector.load %arg3[%c0_1, %c0_2] : memref<8x128xf32, #tpu.memory_space<vmem>>, vector<8x128xf32>
    %c0_3 = arith.constant 0 : index
    %7 = memref.load %arg4[%c0_3] : memref<1xf32, #tpu.memory_space<smem>>
    %c0_4 = arith.constant 0 : index
    %c0_5 = arith.constant 0 : index
    %8 = vector.load %arg1[%c0_4, %c0_5] : memref<4x128xf32, #tpu.memory_space<vmem>>, vector<4x128xf32>
    %9 = vector.extract_strided_slice %8 {offsets = [0, 0], sizes = [1, 128], strides = [1, 1]} : vector<4x128xf32> to vector<1x128xf32>
    %10 = vector.broadcast %1 : vector<128x1xf32> to vector<128x128xf32>
    %11 = vector.broadcast %9 : vector<1x128xf32> to vector<128x128xf32>
    %12 = arith.mulf %10, %11 : vector<128x128xf32>
    %13 = vector.broadcast %5 : vector<128x1xf32> to vector<128x128xf32>
    %14 = arith.addf %13, %12 : vector<128x128xf32>
    %15 = vector.extract_strided_slice %8 {offsets = [1, 0], sizes = [1, 128], strides = [1, 1]} : vector<4x128xf32> to vector<1x128xf32>
    %16 = vector.broadcast %2 : vector<128x1xf32> to vector<128x128xf32>
    %17 = vector.broadcast %15 : vector<1x128xf32> to vector<128x128xf32>
    %18 = arith.mulf %16, %17 : vector<128x128xf32>
    %19 = arith.addf %14, %18 : vector<128x128xf32>
    %20 = vector.extract_strided_slice %8 {offsets = [2, 0], sizes = [1, 128], strides = [1, 1]} : vector<4x128xf32> to vector<1x128xf32>
    %21 = vector.broadcast %3 : vector<128x1xf32> to vector<128x128xf32>
    %22 = vector.broadcast %20 : vector<1x128xf32> to vector<128x128xf32>
    %23 = arith.mulf %21, %22 : vector<128x128xf32>
    %24 = arith.addf %19, %23 : vector<128x128xf32>
    %25 = vector.extract_strided_slice %8 {offsets = [3, 0], sizes = [1, 128], strides = [1, 1]} : vector<4x128xf32> to vector<1x128xf32>
    %26 = vector.broadcast %4 : vector<128x1xf32> to vector<128x128xf32>
    %27 = vector.broadcast %25 : vector<1x128xf32> to vector<128x128xf32>
    %28 = arith.mulf %26, %27 : vector<128x128xf32>
    %29 = arith.addf %24, %28 : vector<128x128xf32>
    %cst = arith.constant 0.000000e+00 : f32
    %30 = vector.broadcast %cst : f32 to vector<128x128xf32>
    %31 = arith.maximumf %29, %30 : vector<128x128xf32>
    %cst_6 = arith.constant dense<0.000000e+00> : vector<8x128xf32>
    %32 = tpu.matmul %6, %31, %cst_6 {dimension_numbers = #tpu.dot_dimension_numbers<[1], [0], [0], [1], [0, 0, 1, 1], [], []>, precision = #tpu.contract_precision<fp32>} : vector<8x128xf32>, vector<128x128xf32>, vector<8x128xf32> -> vector<8x128xf32>
    %33 = vector.extract_strided_slice %32 {offsets = [0, 0], sizes = [1, 128], strides = [1, 1]} : vector<8x128xf32> to vector<1x128xf32>
    %34 = vector.broadcast %7 : f32 to vector<1x128xf32>
    %35 = arith.addf %33, %34 : vector<1x128xf32>
    %c0_7 = arith.constant 0 : index
    %c0_8 = arith.constant 0 : index
    %36 = vector.load %arg5[%c0_7, %c0_8] : memref<1x128xf32, #tpu.memory_space<vmem>>, vector<1x128xf32>
    tpu.vector_store %arg5[%c0_7, %c0_8], %35 {strides = array<i32>} : memref<1x128xf32, #tpu.memory_space<vmem>>, vector<1x128xf32>,
    return
  }
  func.func @transform_0(%arg0: i32) -> (i32, i32) {
    %c0_i32 = arith.constant 0 : i32
    %c0_i32_0 = arith.constant 0 : i32
    return %c0_i32, %arg0 : i32, i32
  }
  func.func @transform_1(%arg0: i32) -> (i32, i32) {
    %c0_i32 = arith.constant 0 : i32
    %c0_i32_0 = arith.constant 0 : i32
    %c0_i32_1 = arith.constant 0 : i32
    return %c0_i32, %c0_i32_0 : i32, i32
  }
  func.func @transform_2(%arg0: i32) -> (i32, i32) {
    %c0_i32 = arith.constant 0 : i32
    %c0_i32_0 = arith.constant 0 : i32
    %c0_i32_1 = arith.constant 0 : i32
    return %c0_i32, %c0_i32_0 : i32, i32
  }
  func.func @transform_3(%arg0: i32) -> i32 {
    %c0_i32 = arith.constant 0 : i32
    %c0_i32_0 = arith.constant 0 : i32
    return %c0_i32 : i32
  }
  func.func @transform_4(%arg0: i32) -> (i32, i32) {
    %c0_i32 = arith.constant 0 : i32
    %c0_i32_0 = arith.constant 0 : i32
    return %c0_i32, %arg0 : i32, i32
  }
}

</mosaic_0001>

<llo_original>
// kernel: critic_forward.1
$region0: #{critic_forward.1}
  #allocation0 [shape = 'u32[]', space=smem, size = 0x4, offset = 0x4, fixed_abs, tag = 'smem constant byte address 0x4 - core index']
  #allocation1 [shape = 'u32[72,128]{1,0:T(1,128)}', space=vmem, size = 0x9000, scoped, tag = 'internal scratch']
  #allocation2 [shape = 'f32[1]{0:T(128)S(6)}', space=smem, size = 0x200, scoped, tag = 'scoped memory for critic_forward.1']
  %s0 = inlined_call_operand.vmem [shape: f32[4,128], index: 0, kind: input, shape index: {}]
  %s1 = inlined_call_operand.vmem [shape: f32[128,5], index: 1, kind: input, shape index: {}]
  %s2 = inlined_call_operand.vmem [shape: f32[8,128], index: 2, kind: input, shape index: {}]
  %s3 = inlined_call_operand.<no memory space> [shape: f32[1], index: 3, kind: input, shape index: {}]
  %s4 = inlined_call_operand.vmem [shape: f32[1,128], index: 4, kind: output, shape index: {}]
  %s5 = sld [smem:[#allocation0]]
  $region26: #{critic_forward.1} parent=0
    _
  %s7 = ssub.s32 1, %s5
  %s8 = scalar_select 0, %s7, %s5
  %9 = sst [smem:[#allocation2]] %s3
  // Predicated region
  $region2: #{critic_forward.1} parent=0 // pred_check
    _
  $region3: #{critic_forward.1} parent=0 // pred_check_branch
    %11 = sbr.rel (0) target = $region5
  $region4: #{critic_forward.1} parent=0 // pred_region
    _
  $region5: #{critic_forward.1} parent=0 // pred_fallthru
    _
  // Predicated region
  $region6: #{critic_forward.1} parent=0 // pred_check
    _
  $region7: #{critic_forward.1} parent=0 // pred_check_branch
    %13 = sbr.rel (0) target = $region9
  $region8: #{critic_forward.1} parent=0 // pred_region
    _
  $region9: #{critic_forward.1} parent=0 // pred_fallthru
    _
  // Predicated region
  $region10: #{critic_forward.1} parent=0 // pred_check
    _
  $region11: #{critic_forward.1} parent=0 // pred_check_branch
    %15 = sbr.rel (0) target = $region13
  $region12: #{critic_forward.1} parent=0 // pred_region
    _
  $region13: #{critic_forward.1} parent=0 // pred_fallthru
    _
  // Predicated region
  $region14: #{critic_forward.1} parent=0 // pred_check
    _
  $region15: #{critic_forward.1} parent=0 // pred_check_branch
    %17 = sbr.rel (0) target = $region17
  $region16: #{critic_forward.1} parent=0 // pred_region
    _
  $region17: #{critic_forward.1} parent=0 // pred_fallthru
    _
  %v18 = vld [vmem:[%s1] sm:$0xff]
  %v19 = vld [vmem:[%s1 + $0x8] sm:$0xff]
  %v20 = vld [vmem:[%s1 + $0x10] sm:$0xff]
  %v21 = vld [vmem:[%s1 + $0x18] sm:$0xff]
  %v22 = vld [vmem:[%s1 + $0x20] sm:$0xff]
  %v23 = vld [vmem:[%s1 + $0x28] sm:$0xff]
  %v24 = vld [vmem:[%s1 + $0x30] sm:$0xff]
  %v25 = vld [vmem:[%s1 + $0x38] sm:$0xff]
  %v26 = vld [vmem:[%s1 + $0x40] sm:$0xff]
  %v27 = vld [vmem:[%s1 + $0x48] sm:$0xff]
  %v28 = vld [vmem:[%s1 + $0x50] sm:$0xff]
  %v29 = vld [vmem:[%s1 + $0x58] sm:$0xff]
  %v30 = vld [vmem:[%s1 + $0x60] sm:$0xff]
  %v31 = vld [vmem:[%s1 + $0x68] sm:$0xff]
  %v32 = vld [vmem:[%s1 + $0x70] sm:$0xff]
  %v33 = vld [vmem:[%s1 + $0x78] sm:$0xff]
  %v34 = vld [vmem:[%s2] sm:$0xff]
  %s35 = sld [smem:[#allocation2]]
  %v36 = vld [vmem:[%s0] sm:$0xf]
  %38 = vset.pattern.permute.xlu0 0
  %39 = vperm.xlu0 %38, %v18
  %v40 = vpop.permute.xlu0 %39
  %43 = vset.pattern.permute.xlu0 0
  %44 = vperm.xlu0 %43, %v19
  %v45 = vpop.permute.xlu0 %44
  %48 = vset.pattern.permute.xlu0 0
  %49 = vperm.xlu0 %48, %v20
  %v50 = vpop.permute.xlu0 %49
  %53 = vset.pattern.permute.xlu0 0
  %54 = vperm.xlu0 %53, %v21
  %v55 = vpop.permute.xlu0 %54
  %58 = vset.pattern.permute.xlu0 0
  %59 = vperm.xlu0 %58, %v22
  %v60 = vpop.permute.xlu0 %59
  %63 = vset.pattern.permute.xlu0 0
  %64 = vperm.xlu0 %63, %v23
  %v65 = vpop.permute.xlu0 %64
  %68 = vset.pattern.permute.xlu0 0
  %69 = vperm.xlu0 %68, %v24
  %v70 = vpop.permute.xlu0 %69
  %73 = vset.pattern.permute.xlu0 0
  %74 = vperm.xlu0 %73, %v25
  %v75 = vpop.permute.xlu0 %74
  %78 = vset.pattern.permute.xlu0 0
  %79 = vperm.xlu0 %78, %v26
  %v80 = vpop.permute.xlu0 %79
  %83 = vset.pattern.permute.xlu0 0
  %84 = vperm.xlu0 %83, %v27
  %v85 = vpop.permute.xlu0 %84
  %88 = vset.pattern.permute.xlu0 0
  %89 = vperm.xlu0 %88, %v28
  %v90 = vpop.permute.xlu0 %89
  %93 = vset.pattern.permute.xlu0 0
  %94 = vperm.xlu0 %93, %v29
  %v95 = vpop.permute.xlu0 %94
  %98 = vset.pattern.permute.xlu0 0
  %99 = vperm.xlu0 %98, %v30
  %v100 = vpop.permute.xlu0 %99
  %103 = vset.pattern.permute.xlu0 0
  %104 = vperm.xlu0 %103, %v31
  %v105 = vpop.permute.xlu0 %104
  %108 = vset.pattern.permute.xlu0 0
  %109 = vperm.xlu0 %108, %v32
  %v110 = vpop.permute.xlu0 %109
  %113 = vset.pattern.permute.xlu0 0
  %114 = vperm.xlu0 %113, %v33
  %v115 = vpop.permute.xlu0 %114
  %v117 = vperm.slane %v36, 0
  %v118 = vmul.f32 %v40, %v117
  %v119 = vmul.f32 %v45, %v117
  %v120 = vmul.f32 %v50, %v117
  %v121 = vmul.f32 %v55, %v117
  %v122 = vmul.f32 %v60, %v117
  %v123 = vmul.f32 %v65, %v117
  %v124 = vmul.f32 %v70, %v117
  %v125 = vmul.f32 %v75, %v117
  %v126 = vmul.f32 %v80, %v117
  %v127 = vmul.f32 %v85, %v117
  %v128 = vmul.f32 %v90, %v117
  %v129 = vmul.f32 %v95, %v117
  %v130 = vmul.f32 %v100, %v117
  %v131 = vmul.f32 %v105, %v117
  %v132 = vmul.f32 %v110, %v117
  %v133 = vmul.f32 %v115, %v117
  %134 = vset.pattern.permute.xlu0 4
  %135 = vperm.xlu0 %134, %v18
  %v136 = vpop.permute.xlu0 %135
  %138 = vset.pattern.permute.xlu0 4
  %139 = vperm.xlu0 %138, %v19
  %v140 = vpop.permute.xlu0 %139
  %142 = vset.pattern.permute.xlu0 4
  %143 = vperm.xlu0 %142, %v20
  %v144 = vpop.permute.xlu0 %143
  %146 = vset.pattern.permute.xlu0 4
  %147 = vperm.xlu0 %146, %v21
  %v148 = vpop.permute.xlu0 %147
  %150 = vset.pattern.permute.xlu0 4
  %151 = vperm.xlu0 %150, %v22
  %v152 = vpop.permute.xlu0 %151
  %154 = vset.pattern.permute.xlu0 4
  %155 = vperm.xlu0 %154, %v23
  %v156 = vpop.permute.xlu0 %155
  %158 = vset.pattern.permute.xlu0 4
  %159 = vperm.xlu0 %158, %v24
  %v160 = vpop.permute.xlu0 %159
  %162 = vset.pattern.permute.xlu0 4
  %163 = vperm.xlu0 %162, %v25
  %v164 = vpop.permute.xlu0 %163
  %166 = vset.pattern.permute.xlu0 4
  %167 = vperm.xlu0 %166, %v26
  %v168 = vpop.permute.xlu0 %167
  %170 = vset.pattern.permute.xlu0 4
  %171 = vperm.xlu0 %170, %v27
  %v172 = vpop.permute.xlu0 %171
  %174 = vset.pattern.permute.xlu0 4
  %175 = vperm.xlu0 %174, %v28
  %v176 = vpop.permute.xlu0 %175
  %178 = vset.pattern.permute.xlu0 4
  %179 = vperm.xlu0 %178, %v29
  %v180 = vpop.permute.xlu0 %179
  %182 = vset.pattern.permute.xlu0 4
  %183 = vperm.xlu0 %182, %v30
  %v184 = vpop.permute.xlu0 %183
  %186 = vset.pattern.permute.xlu0 4
  %187 = vperm.xlu0 %186, %v31
  %v188 = vpop.permute.xlu0 %187
  %190 = vset.pattern.permute.xlu0 4
  %191 = vperm.xlu0 %190, %v32
  %v192 = vpop.permute.xlu0 %191
  %194 = vset.pattern.permute.xlu0 4
  %195 = vperm.xlu0 %194, %v33
  %v196 = vpop.permute.xlu0 %195
  %v198 = vadd.f32 %v136, %v118
  %v199 = vadd.f32 %v140, %v119
  %v200 = vadd.f32 %v144, %v120
  %v201 = vadd.f32 %v148, %v121
  %v202 = vadd.f32 %v152, %v122
  %v203 = vadd.f32 %v156, %v123
  %v204 = vadd.f32 %v160, %v124
  %v205 = vadd.f32 %v164, %v125
  %v206 = vadd.f32 %v168, %v126
  %v207 = vadd.f32 %v172, %v127
  %v208 = vadd.f32 %v176, %v128
  %v209 = vadd.f32 %v180, %v129
  %v210 = vadd.f32 %v184, %v130
  %v211 = vadd.f32 %v188, %v131
  %v212 = vadd.f32 %v192, %v132
  %v213 = vadd.f32 %v196, %v133
  %214 = vset.pattern.permute.xlu0 1
  %215 = vperm.xlu0 %214, %v18
  %v216 = vpop.permute.xlu0 %215
  %218 = vset.pattern.permute.xlu0 1
  %219 = vperm.xlu0 %218, %v19
  %v220 = vpop.permute.xlu0 %219
  %222 = vset.pattern.permute.xlu0 1
  %223 = vperm.xlu0 %222, %v20
  %v224 = vpop.permute.xlu0 %223
  %226 = vset.pattern.permute.xlu0 1
  %227 = vperm.xlu0 %226, %v21
  %v228 = vpop.permute.xlu0 %227
  %230 = vset.pattern.permute.xlu0 1
  %231 = vperm.xlu0 %230, %v22
  %v232 = vpop.permute.xlu0 %231
  %234 = vset.pattern.permute.xlu0 1
  %235 = vperm.xlu0 %234, %v23
  %v236 = vpop.permute.xlu0 %235
  %238 = vset.pattern.permute.xlu0 1
  %239 = vperm.xlu0 %238, %v24
  %v240 = vpop.permute.xlu0 %239
  %242 = vset.pattern.permute.xlu0 1
  %243 = vperm.xlu0 %242, %v25
  %v244 = vpop.permute.xlu0 %243
  %246 = vset.pattern.permute.xlu0 1
  %247 = vperm.xlu0 %246, %v26
  %v248 = vpop.permute.xlu0 %247
  %250 = vset.pattern.permute.xlu0 1
  %251 = vperm.xlu0 %250, %v27
  %v252 = vpop.permute.xlu0 %251
  %254 = vset.pattern.permute.xlu0 1
  %255 = vperm.xlu0 %254, %v28
  %v256 = vpop.permute.xlu0 %255
  %258 = vset.pattern.permute.xlu0 1
  %259 = vperm.xlu0 %258, %v29
  %v260 = vpop.permute.xlu0 %259
  %262 = vset.pattern.permute.xlu0 1
  %263 = vperm.xlu0 %262, %v30
  %v264 = vpop.permute.xlu0 %263
  %266 = vset.pattern.permute.xlu0 1
  %267 = vperm.xlu0 %266, %v31
  %v268 = vpop.permute.xlu0 %267
  %270 = vset.pattern.permute.xlu0 1
  %271 = vperm.xlu0 %270, %v32
  %v272 = vpop.permute.xlu0 %271
  %274 = vset.pattern.permute.xlu0 1
  %275 = vperm.xlu0 %274, %v33
  %v276 = vpop.permute.xlu0 %275
  %v278 = vperm.slane %v36, 1
  %v279 = vmul.f32 %v216, %v278
  %v280 = vmul.f32 %v220, %v278
  %v281 = vmul.f32 %v224, %v278
  %v282 = vmul.f32 %v228, %v278
  %v283 = vmul.f32 %v232, %v278
  %v284 = vmul.f32 %v236, %v278
  %v285 = vmul.f32 %v240, %v278
  %v286 = vmul.f32 %v244, %v278
  %v287 = vmul.f32 %v248, %v278
  %v288 = vmul.f32 %v252, %v278
  %v289 = vmul.f32 %v256, %v278
  %v290 = vmul.f32 %v260, %v278
  %v291 = vmul.f32 %v264, %v278
  %v292 = vmul.f32 %v268, %v278
  %v293 = vmul.f32 %v272, %v278
  %v294 = vmul.f32 %v276, %v278
  %v295 = vadd.f32 %v198, %v279
  %v296 = vadd.f32 %v199, %v280
  %v297 = vadd.f32 %v200, %v281
  %v298 = vadd.f32 %v201, %v282
  %v299 = vadd.f32 %v202, %v283
  %v300 = vadd.f32 %v203, %v284
  %v301 = vadd.f32 %v204, %v285
  %v302 = vadd.f32 %v205, %v286
  %v303 = vadd.f32 %v206, %v287
  %v304 = vadd.f32 %v207, %v288
  %v305 = vadd.f32 %v208, %v289
  %v306 = vadd.f32 %v209, %v290
  %v307 = vadd.f32 %v210, %v291
  %v308 = vadd.f32 %v211, %v292
  %v309 = vadd.f32 %v212, %v293
  %v310 = vadd.f32 %v213, %v294
  %311 = vset.pattern.permute.xlu0 2
  %312 = vperm.xlu0 %311, %v18
  %v313 = vpop.permute.xlu0 %312
  %315 = vset.pattern.permute.xlu0 2
  %316 = vperm.xlu0 %315, %v19
  %v317 = vpop.permute.xlu0 %316
  %319 = vset.pattern.permute.xlu0 2
  %320 = vperm.xlu0 %319, %v20
  %v321 = vpop.permute.xlu0 %320
  %323 = vset.pattern.permute.xlu0 2
  %324 = vperm.xlu0 %323, %v21
  %v325 = vpop.permute.xlu0 %324
  %327 = vset.pattern.permute.xlu0 2
  %328 = vperm.xlu0 %327, %v22
  %v329 = vpop.permute.xlu0 %328
  %331 = vset.pattern.permute.xlu0 2
  %332 = vperm.xlu0 %331, %v23
  %v333 = vpop.permute.xlu0 %332
  %335 = vset.pattern.permute.xlu0 2
  %336 = vperm.xlu0 %335, %v24
  %v337 = vpop.permute.xlu0 %336
  %339 = vset.pattern.permute.xlu0 2
  %340 = vperm.xlu0 %339, %v25
  %v341 = vpop.permute.xlu0 %340
  %343 = vset.pattern.permute.xlu0 2
  %344 = vperm.xlu0 %343, %v26
  %v345 = vpop.permute.xlu0 %344
  %347 = vset.pattern.permute.xlu0 2
  %348 = vperm.xlu0 %347, %v27
  %v349 = vpop.permute.xlu0 %348
  %351 = vset.pattern.permute.xlu0 2
  %352 = vperm.xlu0 %351, %v28
  %v353 = vpop.permute.xlu0 %352
  %355 = vset.pattern.permute.xlu0 2
  %356 = vperm.xlu0 %355, %v29
  %v357 = vpop.permute.xlu0 %356
  %359 = vset.pattern.permute.xlu0 2
  %360 = vperm.xlu0 %359, %v30
  %v361 = vpop.permute.xlu0 %360
  %363 = vset.pattern.permute.xlu0 2
  %364 = vperm.xlu0 %363, %v31
  %v365 = vpop.permute.xlu0 %364
  %367 = vset.pattern.permute.xlu0 2
  %368 = vperm.xlu0 %367, %v32
  %v369 = vpop.permute.xlu0 %368
  %371 = vset.pattern.permute.xlu0 2
  %372 = vperm.xlu0 %371, %v33
  %v373 = vpop.permute.xlu0 %372
  %v375 = vperm.slane %v36, 2
  %v376 = vmul.f32 %v313, %v375
  %v377 = vmul.f32 %v317, %v375
  %v378 = vmul.f32 %v321, %v375
  %v379 = vmul.f32 %v325, %v375
  %v380 = vmul.f32 %v329, %v375
  %v381 = vmul.f32 %v333, %v375
  %v382 = vmul.f32 %v337, %v375
  %v383 = vmul.f32 %v341, %v375
  %v384 = vmul.f32 %v345, %v375
  %v385 = vmul.f32 %v349, %v375
  %v386 = vmul.f32 %v353, %v375
  %v387 = vmul.f32 %v357, %v375
  %v388 = vmul.f32 %v361, %v375
  %v389 = vmul.f32 %v365, %v375
  %v390 = vmul.f32 %v369, %v375
  %v391 = vmul.f32 %v373, %v375
  %v392 = vadd.f32 %v295, %v376
  %v393 = vadd.f32 %v296, %v377
  %v394 = vadd.f32 %v297, %v378
  %v395 = vadd.f32 %v298, %v379
  %v396 = vadd.f32 %v299, %v380
  %v397 = vadd.f32 %v300, %v381
  %v398 = vadd.f32 %v301, %v382
  %v399 = vadd.f32 %v302, %v383
  %v400 = vadd.f32 %v303, %v384
  %v401 = vadd.f32 %v304, %v385
  %v402 = vadd.f32 %v305, %v386
  %v403 = vadd.f32 %v306, %v387
  %v404 = vadd.f32 %v307, %v388
  %v405 = vadd.f32 %v308, %v389
  %v406 = vadd.f32 %v309, %v390
  %v407 = vadd.f32 %v310, %v391
  %408 = vset.pattern.permute.xlu0 3
  %409 = vperm.xlu0 %408, %v18
  %v410 = vpop.permute.xlu0 %409
  %412 = vset.pattern.permute.xlu0 3
  %413 = vperm.xlu0 %412, %v19
  %v414 = vpop.permute.xlu0 %413
  %416 = vset.pattern.permute.xlu0 3
  %417 = vperm.xlu0 %416, %v20
  %v418 = vpop.permute.xlu0 %417
  %420 = vset.pattern.permute.xlu0 3
  %421 = vperm.xlu0 %420, %v21
  %v422 = vpop.permute.xlu0 %421
  %424 = vset.pattern.permute.xlu0 3
  %425 = vperm.xlu0 %424, %v22
  %v426 = vpop.permute.xlu0 %425
  %428 = vset.pattern.permute.xlu0 3
  %429 = vperm.xlu0 %428, %v23
  %v430 = vpop.permute.xlu0 %429
  %432 = vset.pattern.permute.xlu0 3
  %433 = vperm.xlu0 %432, %v24
  %v434 = vpop.permute.xlu0 %433
  %436 = vset.pattern.permute.xlu0 3
  %437 = vperm.xlu0 %436, %v25
  %v438 = vpop.permute.xlu0 %437
  %440 = vset.pattern.permute.xlu0 3
  %441 = vperm.xlu0 %440, %v26
  %v442 = vpop.permute.xlu0 %441
  %444 = vset.pattern.permute.xlu0 3
  %445 = vperm.xlu0 %444, %v27
  %v446 = vpop.permute.xlu0 %445
  %448 = vset.pattern.permute.xlu0 3
  %449 = vperm.xlu0 %448, %v28
  %v450 = vpop.permute.xlu0 %449
  %452 = vset.pattern.permute.xlu0 3
  %453 = vperm.xlu0 %452, %v29
  %v454 = vpop.permute.xlu0 %453
  %456 = vset.pattern.permute.xlu0 3
  %457 = vperm.xlu0 %456, %v30
  %v458 = vpop.permute.xlu0 %457
  %460 = vset.pattern.permute.xlu0 3
  %461 = vperm.xlu0 %460, %v31
  %v462 = vpop.permute.xlu0 %461
  %464 = vset.pattern.permute.xlu0 3
  %465 = vperm.xlu0 %464, %v32
  %v466 = vpop.permute.xlu0 %465
  %468 = vset.pattern.permute.xlu0 3
  %469 = vperm.xlu0 %468, %v33
  %v470 = vpop.permute.xlu0 %469
  %v472 = vperm.slane %v36, 3
  %v473 = vmul.f32 %v410, %v472
  %v474 = vmul.f32 %v414, %v472
  %v475 = vmul.f32 %v418, %v472
  %v476 = vmul.f32 %v422, %v472
  %v477 = vmul.f32 %v426, %v472
  %v478 = vmul.f32 %v430, %v472
  %v479 = vmul.f32 %v434, %v472
  %v480 = vmul.f32 %v438, %v472
  %v481 = vmul.f32 %v442, %v472
  %v482 = vmul.f32 %v446, %v472
  %v483 = vmul.f32 %v450, %v472
  %v484 = vmul.f32 %v454, %v472
  %v485 = vmul.f32 %v458, %v472
  %v486 = vmul.f32 %v462, %v472
  %v487 = vmul.f32 %v466, %v472
  %v488 = vmul.f32 %v470, %v472
  %v489 = vadd.f32 %v392, %v473
  %v490 = vadd.f32 %v393, %v474
  %v491 = vadd.f32 %v394, %v475
  %v492 = vadd.f32 %v395, %v476
  %v493 = vadd.f32 %v396, %v477
  %v494 = vadd.f32 %v397, %v478
  %v495 = vadd.f32 %v398, %v479
  %v496 = vadd.f32 %v399, %v480
  %v497 = vadd.f32 %v400, %v481
  %v498 = vadd.f32 %v401, %v482
  %v499 = vadd.f32 %v402, %v483
  %v500 = vadd.f32 %v403, %v484
  %v501 = vadd.f32 %v404, %v485
  %v502 = vadd.f32 %v405, %v486
  %v503 = vadd.f32 %v406, %v487
  %v504 = vadd.f32 %v407, %v488
  %v505 = vmax.f32 %v489, 0.0
  %v506 = vmax.f32 %v490, 0.0
  %v507 = vmax.f32 %v491, 0.0
  %v508 = vmax.f32 %v492, 0.0
  %v509 = vmax.f32 %v493, 0.0
  %v510 = vmax.f32 %v494, 0.0
  %v511 = vmax.f32 %v495, 0.0
  %v512 = vmax.f32 %v496, 0.0
  %v513 = vmax.f32 %v497, 0.0
  %v514 = vmax.f32 %v498, 0.0
  %v515 = vmax.f32 %v499, 0.0
  %v516 = vmax.f32 %v500, 0.0
  %v517 = vmax.f32 %v501, 0.0
  %v518 = vmax.f32 %v502, 0.0
  %v519 = vmax.f32 %v503, 0.0
  %v520 = vmax.f32 %v504, 0.0
  %v521 = vand.u32 %v520, 4294901760
  %522 = vmatpush.msra.mxu0 %v521
  %v523 = vand.u32 %v519, 4294901760
  %524 = vmatpush.msra.mxu0 %v523
  %v525 = vand.u32 %v518, 4294901760
  %526 = vmatpush.msra.mxu0 %v525
  %v527 = vand.u32 %v517, 4294901760
  %528 = vmatpush.msra.mxu0 %v527
  %v529 = vand.u32 %v516, 4294901760
  %530 = vmatpush.msra.mxu0 %v529
  %v531 = vand.u32 %v515, 4294901760
  %532 = vmatpush.msra.mxu0 %v531
  %v533 = vand.u32 %v514, 4294901760
  %534 = vmatpush.msra.mxu0 %v533
  %v535 = vand.u32 %v513, 4294901760
  %536 = vmatpush.msra.mxu0 %v535
  %v537 = vand.u32 %v512, 4294901760
  %538 = vmatpush.msra.mxu0 %v537
  %v539 = vand.u32 %v511, 4294901760
  %540 = vmatpush.msra.mxu0 %v539
  %v541 = vand.u32 %v510, 4294901760
  %542 = vmatpush.msra.mxu0 %v541
  %v543 = vand.u32 %v509, 4294901760
  %544 = vmatpush.msra.mxu0 %v543
  %v545 = vand.u32 %v508, 4294901760
  %546 = vmatpush.msra.mxu0 %v545
  %v547 = vand.u32 %v507, 4294901760
  %548 = vmatpush.msra.mxu0 %v547
  %v549 = vand.u32 %v506, 4294901760
  %550 = vmatpush.msra.mxu0 %v549
  %v551 = vand.u32 %v505, 4294901760
  %552 = vmatpush.msra.mxu0 %v551
  %v553 = vand.u32 %v34, 4294901760
  %v554 = vsub.f32 %v34, %v553
  %v555 = vand.u32 %v554, 4294901760
  %v556 = vsub.f32 %v554, %v555
  %v557 = vand.u32 %v556, 4294901760
  %558 = vmatmul.f32.gmra.mxu0 %v557
  %v559 = vpop.f32.mrf.mxu0
  %v560 = vadd.f32 0.0, %v559
  %561 = vdwg.mxu0
  %v562 = vand.u32 %v520, 4294901760
  %v563 = vsub.f32 %v520, %v562
  %v564 = vand.u32 %v563, 4294901760
  %v565 = vsub.f32 %v563, %v564
  %v566 = vand.u32 %v565, 4294901760
  %567 = vmatpush.msra.mxu0 %v566
  %v568 = vand.u32 %v519, 4294901760
  %v569 = vsub.f32 %v519, %v568
  %v570 = vand.u32 %v569, 4294901760
  %v571 = vsub.f32 %v569, %v570
  %v572 = vand.u32 %v571, 4294901760
  %573 = vmatpush.msra.mxu0 %v572
  %v574 = vand.u32 %v518, 4294901760
  %v575 = vsub.f32 %v518, %v574
  %v576 = vand.u32 %v575, 4294901760
  %v577 = vsub.f32 %v575, %v576
  %v578 = vand.u32 %v577, 4294901760
  %579 = vmatpush.msra.mxu0 %v578
  %v580 = vand.u32 %v517, 4294901760
  %v581 = vsub.f32 %v517, %v580
  %v582 = vand.u32 %v581, 4294901760
  %v583 = vsub.f32 %v581, %v582
  %v584 = vand.u32 %v583, 4294901760
  %585 = vmatpush.msra.mxu0 %v584
  %v586 = vand.u32 %v516, 4294901760
  %v587 = vsub.f32 %v516, %v586
  %v588 = vand.u32 %v587, 4294901760
  %v589 = vsub.f32 %v587, %v588
  %v590 = vand.u32 %v589, 4294901760
  %591 = vmatpush.msra.mxu0 %v590
  %v592 = vand.u32 %v515, 4294901760
  %v593 = vsub.f32 %v515, %v592
  %v594 = vand.u32 %v593, 4294901760
  %v595 = vsub.f32 %v593, %v594
  %v596 = vand.u32 %v595, 4294901760
  %597 = vmatpush.msra.mxu0 %v596
  %v598 = vand.u32 %v514, 4294901760
  %v599 = vsub.f32 %v514, %v598
  %v600 = vand.u32 %v599, 4294901760
  %v601 = vsub.f32 %v599, %v600
  %v602 = vand.u32 %v601, 4294901760
  %603 = vmatpush.msra.mxu0 %v602
  %v604 = vand.u32 %v513, 4294901760
  %v605 = vsub.f32 %v513, %v604
  %v606 = vand.u32 %v605, 4294901760
  %v607 = vsub.f32 %v605, %v606
  %v608 = vand.u32 %v607, 4294901760
  %609 = vmatpush.msra.mxu0 %v608
  %v610 = vand.u32 %v512, 4294901760
  %v611 = vsub.f32 %v512, %v610
  %v612 = vand.u32 %v611, 4294901760
  %v613 = vsub.f32 %v611, %v612
  %v614 = vand.u32 %v613, 4294901760
  %615 = vmatpush.msra.mxu0 %v614
  %v616 = vand.u32 %v511, 4294901760
  %v617 = vsub.f32 %v511, %v616
  %v618 = vand.u32 %v617, 4294901760
  %v619 = vsub.f32 %v617, %v618
  %v620 = vand.u32 %v619, 4294901760
  %621 = vmatpush.msra.mxu0 %v620
  %v622 = vand.u32 %v510, 4294901760
  %v623 = vsub.f32 %v510, %v622
  %v624 = vand.u32 %v623, 4294901760
  %v625 = vsub.f32 %v623, %v624
  %v626 = vand.u32 %v625, 4294901760
  %627 = vmatpush.msra.mxu0 %v626
  %v628 = vand.u32 %v509, 4294901760
  %v629 = vsub.f32 %v509, %v628
  %v630 = vand.u32 %v629, 4294901760
  %v631 = vsub.f32 %v629, %v630
  %v632 = vand.u32 %v631, 4294901760
  %633 = vmatpush.msra.mxu0 %v632
  %v634 = vand.u32 %v508, 4294901760
  %v635 = vsub.f32 %v508, %v634
  %v636 = vand.u32 %v635, 4294901760
  %v637 = vsub.f32 %v635, %v636
  %v638 = vand.u32 %v637, 4294901760
  %639 = vmatpush.msra.mxu0 %v638
  %v640 = vand.u32 %v507, 4294901760
  %v641 = vsub.f32 %v507, %v640
  %v642 = vand.u32 %v641, 4294901760
  %v643 = vsub.f32 %v641, %v642
  %v644 = vand.u32 %v643, 4294901760
  %645 = vmatpush.msra.mxu0 %v644
  %v646 = vand.u32 %v506, 4294901760
  %v647 = vsub.f32 %v506, %v646
  %v648 = vand.u32 %v647, 4294901760
  %v649 = vsub.f32 %v647, %v648
  %v650 = vand.u32 %v649, 4294901760
  %651 = vmatpush.msra.mxu0 %v650
  %v652 = vand.u32 %v505, 4294901760
  %v653 = vsub.f32 %v505, %v652
  %v654 = vand.u32 %v653, 4294901760
  %v655 = vsub.f32 %v653, %v654
  %v656 = vand.u32 %v655, 4294901760
  %657 = vmatpush.msra.mxu0 %v656
  %v658 = vand.u32 %v34, 4294901760
  %659 = vmatmul.f32.gmra.mxu0 %v658
  %v660 = vpop.f32.mrf.mxu0
  %v661 = vadd.f32 %v560, %v660
  %662 = vdwg.mxu0
  %v663 = vand.u32 %v520, 4294901760
  %v664 = vsub.f32 %v520, %v663
  %665 = vmatpush.msra.mxu0 %v664
  %v666 = vand.u32 %v519, 4294901760
  %v667 = vsub.f32 %v519, %v666
  %668 = vmatpush.msra.mxu0 %v667
  %v669 = vand.u32 %v518, 4294901760
  %v670 = vsub.f32 %v518, %v669
  %671 = vmatpush.msra.mxu0 %v670
  %v672 = vand.u32 %v517, 4294901760
  %v673 = vsub.f32 %v517, %v672
  %674 = vmatpush.msra.mxu0 %v673
  %v675 = vand.u32 %v516, 4294901760
  %v676 = vsub.f32 %v516, %v675
  %677 = vmatpush.msra.mxu0 %v676
  %v678 = vand.u32 %v515, 4294901760
  %v679 = vsub.f32 %v515, %v678
  %680 = vmatpush.msra.mxu0 %v679
  %v681 = vand.u32 %v514, 4294901760
  %v682 = vsub.f32 %v514, %v681
  %683 = vmatpush.msra.mxu0 %v682
  %v684 = vand.u32 %v513, 4294901760
  %v685 = vsub.f32 %v513, %v684
  %686 = vmatpush.msra.mxu0 %v685
  %v687 = vand.u32 %v512, 4294901760
  %v688 = vsub.f32 %v512, %v687
  %689 = vmatpush.msra.mxu0 %v688
  %v690 = vand.u32 %v511, 4294901760
  %v691 = vsub.f32 %v511, %v690
  %692 = vmatpush.msra.mxu0 %v691
  %v693 = vand.u32 %v510, 4294901760
  %v694 = vsub.f32 %v510, %v693
  %695 = vmatpush.msra.mxu0 %v694
  %v696 = vand.u32 %v509, 4294901760
  %v697 = vsub.f32 %v509, %v696
  %698 = vmatpush.msra.mxu0 %v697
  %v699 = vand.u32 %v508, 4294901760
  %v700 = vsub.f32 %v508, %v699
  %701 = vmatpush.msra.mxu0 %v700
  %v702 = vand.u32 %v507, 4294901760
  %v703 = vsub.f32 %v507, %v702
  %704 = vmatpush.msra.mxu0 %v703
  %v705 = vand.u32 %v506, 4294901760
  %v706 = vsub.f32 %v506, %v705
  %707 = vmatpush.msra.mxu0 %v706
  %v708 = vand.u32 %v505, 4294901760
  %v709 = vsub.f32 %v505, %v708
  %710 = vmatpush.msra.mxu0 %v709
  %v711 = vand.u32 %v34, 4294901760
  %v712 = vsub.f32 %v34, %v711
  %713 = vmatmul.f32.gmra.mxu0 %v712
  %v714 = vpop.f32.mrf.mxu0
  %v715 = vadd.f32 %v661, %v714
  %716 = vdwg.mxu0
  %v717 = vand.u32 %v520, 4294901760
  %718 = vmatpush.msra.mxu0 %v717
  %v719 = vand.u32 %v519, 4294901760
  %720 = vmatpush.msra.mxu0 %v719
  %v721 = vand.u32 %v518, 4294901760
  %722 = vmatpush.msra.mxu0 %v721
  %v723 = vand.u32 %v517, 4294901760
  %724 = vmatpush.msra.mxu0 %v723
  %v725 = vand.u32 %v516, 4294901760
  %726 = vmatpush.msra.mxu0 %v725
  %v727 = vand.u32 %v515, 4294901760
  %728 = vmatpush.msra.mxu0 %v727
  %v729 = vand.u32 %v514, 4294901760
  %730 = vmatpush.msra.mxu0 %v729
  %v731 = vand.u32 %v513, 4294901760
  %732 = vmatpush.msra.mxu0 %v731
  %v733 = vand.u32 %v512, 4294901760
  %734 = vmatpush.msra.mxu0 %v733
  %v735 = vand.u32 %v511, 4294901760
  %736 = vmatpush.msra.mxu0 %v735
  %v737 = vand.u32 %v510, 4294901760
  %738 = vmatpush.msra.mxu0 %v737
  %v739 = vand.u32 %v509, 4294901760
  %740 = vmatpush.msra.mxu0 %v739
  %v741 = vand.u32 %v508, 4294901760
  %742 = vmatpush.msra.mxu0 %v741
  %v743 = vand.u32 %v507, 4294901760
  %744 = vmatpush.msra.mxu0 %v743
  %v745 = vand.u32 %v506, 4294901760
  %746 = vmatpush.msra.mxu0 %v745
  %v747 = vand.u32 %v505, 4294901760
  %748 = vmatpush.msra.mxu0 %v747
  %v749 = vand.u32 %v34, 4294901760
  %v750 = vsub.f32 %v34, %v749
  %v751 = vand.u32 %v750, 4294901760
  %752 = vmatmul.f32.gmra.mxu0 %v751
  %v753 = vpop.f32.mrf.mxu0
  %v754 = vadd.f32 %v715, %v753
  %755 = vdwg.mxu0
  %v756 = vand.u32 %v520, 4294901760
  %v757 = vsub.f32 %v520, %v756
  %v758 = vand.u32 %v757, 4294901760
  %759 = vmatpush.msra.mxu0 %v758
  %v760 = vand.u32 %v519, 4294901760
  %v761 = vsub.f32 %v519, %v760
  %v762 = vand.u32 %v761, 4294901760
  %763 = vmatpush.msra.mxu0 %v762
  %v764 = vand.u32 %v518, 4294901760
  %v765 = vsub.f32 %v518, %v764
  %v766 = vand.u32 %v765, 4294901760
  %767 = vmatpush.msra.mxu0 %v766
  %v768 = vand.u32 %v517, 4294901760
  %v769 = vsub.f32 %v517, %v768
  %v770 = vand.u32 %v769, 4294901760
  %771 = vmatpush.msra.mxu0 %v770
  %v772 = vand.u32 %v516, 4294901760
  %v773 = vsub.f32 %v516, %v772
  %v774 = vand.u32 %v773, 4294901760
  %775 = vmatpush.msra.mxu0 %v774
  %v776 = vand.u32 %v515, 4294901760
  %v777 = vsub.f32 %v515, %v776
  %v778 = vand.u32 %v777, 4294901760
  %779 = vmatpush.msra.mxu0 %v778
  %v780 = vand.u32 %v514, 4294901760
  %v781 = vsub.f32 %v514, %v780
  %v782 = vand.u32 %v781, 4294901760
  %783 = vmatpush.msra.mxu0 %v782
  %v784 = vand.u32 %v513, 4294901760
  %v785 = vsub.f32 %v513, %v784
  %v786 = vand.u32 %v785, 4294901760
  %787 = vmatpush.msra.mxu0 %v786
  %v788 = vand.u32 %v512, 4294901760
  %v789 = vsub.f32 %v512, %v788
  %v790 = vand.u32 %v789, 4294901760
  %791 = vmatpush.msra.mxu0 %v790
  %v792 = vand.u32 %v511, 4294901760
  %v793 = vsub.f32 %v511, %v792
  %v794 = vand.u32 %v793, 4294901760
  %795 = vmatpush.msra.mxu0 %v794
  %v796 = vand.u32 %v510, 4294901760
  %v797 = vsub.f32 %v510, %v796
  %v798 = vand.u32 %v797, 4294901760
  %799 = vmatpush.msra.mxu0 %v798
  %v800 = vand.u32 %v509, 4294901760
  %v801 = vsub.f32 %v509, %v800
  %v802 = vand.u32 %v801, 4294901760
  %803 = vmatpush.msra.mxu0 %v802
  %v804 = vand.u32 %v508, 4294901760
  %v805 = vsub.f32 %v508, %v804
  %v806 = vand.u32 %v805, 4294901760
  %807 = vmatpush.msra.mxu0 %v806
  %v808 = vand.u32 %v507, 4294901760
  %v809 = vsub.f32 %v507, %v808
  %v810 = vand.u32 %v809, 4294901760
  %811 = vmatpush.msra.mxu0 %v810
  %v812 = vand.u32 %v506, 4294901760
  %v813 = vsub.f32 %v506, %v812
  %v814 = vand.u32 %v813, 4294901760
  %815 = vmatpush.msra.mxu0 %v814
  %v816 = vand.u32 %v505, 4294901760
  %v817 = vsub.f32 %v505, %v816
  %v818 = vand.u32 %v817, 4294901760
  %819 = vmatpush.msra.mxu0 %v818
  %v820 = vand.u32 %v34, 4294901760
  %821 = vmatmul.f32.gmra.mxu0 %v820
  %v822 = vpop.f32.mrf.mxu0
  %v823 = vadd.f32 %v754, %v822
  %824 = vdwg.mxu0
  %v825 = vand.u32 %v520, 4294901760
  %826 = vmatpush.msra.mxu0 %v825
  %v827 = vand.u32 %v519, 4294901760
  %828 = vmatpush.msra.mxu0 %v827
  %v829 = vand.u32 %v518, 4294901760
  %830 = vmatpush.msra.mxu0 %v829
  %v831 = vand.u32 %v517, 4294901760
  %832 = vmatpush.msra.mxu0 %v831
  %v833 = vand.u32 %v516, 4294901760
  %834 = vmatpush.msra.mxu0 %v833
  %v835 = vand.u32 %v515, 4294901760
  %836 = vmatpush.msra.mxu0 %v835
  %v837 = vand.u32 %v514, 4294901760
  %838 = vmatpush.msra.mxu0 %v837
  %v839 = vand.u32 %v513, 4294901760
  %840 = vmatpush.msra.mxu0 %v839
  %v841 = vand.u32 %v512, 4294901760
  %842 = vmatpush.msra.mxu0 %v841
  %v843 = vand.u32 %v511, 4294901760
  %844 = vmatpush.msra.mxu0 %v843
  %v845 = vand.u32 %v510, 4294901760
  %846 = vmatpush.msra.mxu0 %v845
  %v847 = vand.u32 %v509, 4294901760
  %848 = vmatpush.msra.mxu0 %v847
  %v849 = vand.u32 %v508, 4294901760
  %850 = vmatpush.msra.mxu0 %v849
  %v851 = vand.u32 %v507, 4294901760
  %852 = vmatpush.msra.mxu0 %v851
  %v853 = vand.u32 %v506, 4294901760
  %854 = vmatpush.msra.mxu0 %v853
  %v855 = vand.u32 %v505, 4294901760
  %856 = vmatpush.msra.mxu0 %v855
  %v857 = vand.u32 %v34, 4294901760
  %858 = vmatmul.f32.gmra.mxu0 %v857
  %v859 = vpop.f32.mrf.mxu0
  %v860 = vadd.f32 %v823, %v859
  %861 = vdwg.mxu0
  %v862 = vstv %s35
  %v863 = vadd.f32 %v860, %v862
  %864 = vst [vmem:[%s4] sm:$0x1] %v863
  // Predicated region
  $region18: #{critic_forward.1} parent=0 // pred_check
    _
  $region19: #{critic_forward.1} parent=0 // pred_check_branch
    %866 = sbr.rel (0) target = $region21
  $region20: #{critic_forward.1} parent=0 // pred_region
    _
  $region21: #{critic_forward.1} parent=0 // pred_fallthru
    _
  // Predicated region
  $region22: #{critic_forward.1} parent=0 // pred_check
    _
  $region23: #{critic_forward.1} parent=0 // pred_check_branch
    %868 = sbr.rel (0) target = $region25
  $region24: #{critic_forward.1} parent=0 // pred_region
    _
  $region25: #{critic_forward.1} parent=0 // pred_fallthru
    _

</llo_original>
